<compile_context>
chip_gen: v7x
topology: tpu7x:2x2x1
jax: 0.10.0
libtpu: 0.0.40
codegen_flags: <defaults>
</compile_context>

<pallas_src>
import functools

import jax
import jax.numpy as jnp
import numpy as np
from jax.experimental import pallas as pl
from jax.experimental.pallas import tpu as pltpu

_LANES = 128
_SUBLANES = 8


# ----------------------------------------------------------------------------
# Pallas kernel: apply RX on every selected wire to a (tb, D_pad) row block
# ----------------------------------------------------------------------------
def _rx_wires_kernel(coef_ref, xr_ref, xi_ref, or_ref, oi_ref, *, plan):
    """Apply RX(theta_i) for every applied wire to one lane-dense row block.

    coef_ref : VMEM f32[3*n_applied, D_pad]  per-wire rows [a, sj, sk]
               (zero on the D -> D_pad padding lanes).
    x*_ref   : VMEM f32[tb, D_pad]           real / imag planes, state on lanes.
    o*_ref   : VMEM f32[tb, D_pad]           outputs (aliased onto the inputs).
    plan     : static tuple of partner offsets d = (k-j) * dim**(L-1-wire).
    """
    d_pad = xr_ref.shape[-1]
    xr = xr_ref[...]
    xi = xi_ref[...]

    for pos, d in enumerate(plan):          # static unroll over the applied wires
        r0 = 3 * pos
        a = coef_ref[r0 + 0:r0 + 1, :]      # (1, D_pad), sublane-broadcast rows
        sj = coef_ref[r0 + 1:r0 + 2, :]
        sk = coef_ref[r0 + 2:r0 + 3, :]

        # Partner amplitudes via XLU lane rotation (pltpu.roll == jnp.roll
        # semantics).  digit==j lanes pair with the lane at +d, digit==k lanes
        # with -d; wrapped lanes are multiplied by a zero sj/sk coefficient,
        # so the cyclic wrap is harmless.
        up = (d_pad - d) % d_pad            # out[m] = x[m + d]
        xr_pj = pltpu.roll(xr, up, 1)
        xi_pj = pltpu.roll(xi, up, 1)
        xr_pk = pltpu.roll(xr, d, 1)        # out[m] = x[m - d]
        xi_pk = pltpu.roll(xi, d, 1)

        xr, xi = (xr + a * xr + sj * xi_pj + sk * xi_pk,
                  xi + a * xi - sj * xr_pj - sk * xr_pk)

    or_ref[...] = xr
    oi_ref[...] = xi


# ----------------------------------------------------------------------------
# Tiling / VMEM budgeting helpers
# ----------------------------------------------------------------------------
def _vmem_capacity_bytes():
    try:
        info = pltpu.get_tpu_info()
        return int(getattr(info, "vmem_capacity_bytes", 64 * 1024 * 1024))
    except Exception:
        return 64 * 1024 * 1024  # conservative default (v7x per-TC VMEM)


def _row_tile(n, d_pad, vmem_cap):
    """Largest multiple-of-8 batch-row tile fitting ~40% of VMEM."""
    budget = int(vmem_cap * 0.40)
    # ~14 live (tb, d_pad) f32 copies: 2 in + 2 out planes, double-buffered (8),
    # plus ~6 in-kernel temporaries (rolled partners / new planes).
    per_row = 14 * d_pad * 4
    tb = max(_SUBLANES, (budget // per_row) // _SUBLANES * _SUBLANES)
    n8 = -(-n // _SUBLANES) * _SUBLANES
    return min(tb, n8)


def _apply_rx_factored(coef, xr, xi, *, plan, tb, vmem_cap):
    """Apply the factored RX circuit to lane-dense f32 planes of shape (N_pad, D_pad)."""
    n_pad, d_pad = xr.shape
    n_applied = len(plan)
    grid = (n_pad // tb,)

    state_spec = pl.BlockSpec((tb, d_pad), lambda n: (n, 0))
    coef_spec = pl.BlockSpec(coef.shape, lambda n: (0, 0))

    flops = int(12 * n_applied * n_pad * d_pad)
    bytes_accessed = int(4 * (4 * n_pad * d_pad) + 4 * coef.size * grid[0])

    resident = (8 + 6) * tb * d_pad * 4 + 2 * coef.size * 4 + (2 << 20)
    vmem_limit = int(min(vmem_cap * 3 // 4, max(resident, 32 << 20)))

    out_r, out_i = pl.pallas_call(
        functools.partial(_rx_wires_kernel, plan=plan),
        grid=grid,
        in_specs=[coef_spec, state_spec, state_spec],
        out_specs=(state_spec, state_spec),
        out_shape=(
            jax.ShapeDtypeStruct((n_pad, d_pad), jnp.float32),
            jax.ShapeDtypeStruct((n_pad, d_pad), jnp.float32),
        ),
        input_output_aliases={1: 0, 2: 1},          # xr -> out_r, xi -> out_i
        compiler_params=pltpu.CompilerParams(
            dimension_semantics=("parallel",),       # batch tiles shard across TCs
            vmem_limit_bytes=vmem_limit,
        ),
        cost_estimate=pl.CostEstimate(
            flops=flops, transcendentals=0, bytes_accessed=bytes_accessed),
    )(coef, xr, xi)
    return out_r, out_i


# ----------------------------------------------------------------------------
# RX module (parameter setup + host-side glue in plain JAX / numpy)
# ----------------------------------------------------------------------------
class RX:
    """JAX / Pallas port of quforge.RX (forward pass only)."""

    def __init__(self, j=0, k=1, index=(0,), dim=2, wires=1, angle=False, key=None):
        self.dim = dim
        self.wires = wires
        self.index = tuple(index)
        # The RX factor is symmetric in (j, k); keep them ordered so the
        # partner offset d = (k - j) * dim**(L-1-i) is positive.
        self.j, self.k = (j, k) if j <= k else (k, j)
        if angle is False:
            if key is None:
                key = jax.random.PRNGKey(0)
            # matches nn.Parameter(torch.randn(wires)) in shape/distribution
            self.angle = jax.random.normal(key, (wires,), dtype=jnp.float32)
        else:
            self.angle = jnp.full((wires,), angle, dtype=jnp.float32)

    def __call__(self, x, param=False):
        dim = self.dim
        D = x.shape[0]
        # Exact integer log; assert D is a power of dim (round(log) is fragile).
        L, t = 0, 1
        while t < D:
            t *= dim
            L += 1
        if t != D:
            raise ValueError(f"x.shape[0]={D} is not a power of dim={dim}")

        angles = self.angle if param is False else jnp.asarray(param, jnp.float32)
        applied = [i for i in range(L) if i in self.index]

        squeeze = x.ndim == 1
        x2 = x[:, None] if squeeze else x
        N = x2.shape[1]

        if not applied:                         # identity circuit
            out = x2.astype(jnp.complex64)
            return out[:, 0] if squeeze else out

        d_pad = -(-D // _LANES) * _LANES
        vmem_cap = _vmem_capacity_bytes()
        tb = _row_tile(N, d_pad, vmem_cap)
        n_pad = -(-max(N, _SUBLANES) // tb) * tb

        # Lane-dense f32 planes: state axis D on the 128-lane (last) axis.
        xr = jnp.pad(jnp.real(x2).astype(jnp.float32).T,
                     ((0, n_pad - N), (0, d_pad - D)))
        xi = jnp.pad(jnp.imag(x2).astype(jnp.float32).T,
                     ((0, n_pad - N), (0, d_pad - D)))

        # Per-wire folded coefficient rows: static digit masks (numpy) times
        # traced cos/sin, zeroed on the D -> d_pad padding lanes.
        pos_idx = np.arange(d_pad, dtype=np.int64)
        valid = pos_idx < D
        rows, plan = [], []
        for i in applied:
            B = dim ** (L - 1 - i)
            digit = (pos_idx // B) % dim
            mj = jnp.asarray(((digit == self.j) & valid).astype(np.float32))
            mk = jnp.asarray(((digit == self.k) & valid).astype(np.float32))
            half = angles[i] * 0.5
            c = jnp.cos(half)
            s = jnp.sin(half)
            rows += [(c - 1.0) * (mj + mk), s * mj, s * mk]
            plan.append(int((self.k - self.j) * B))
        coef = jnp.stack(rows, axis=0).astype(jnp.float32)   # (3*n_applied, d_pad)

        out_r, out_i = _apply_rx_factored(coef, xr, xi, plan=tuple(plan),
                                          tb=tb, vmem_cap=vmem_cap)
        out = (out_r[:N, :D] + 1j * out_i[:N, :D]).T.astype(jnp.complex64)
        return out[:, 0] if squeeze else out


# ----------------------------------------------------------------------------
# Dense reference (pure JAX/numpy) — only used to validate the kernel in the demo
# ----------------------------------------------------------------------------
def _dense_rx_unitary(dim, j, k, index, angles, L):
    U = jnp.eye(1, dtype=jnp.complex64)
    for i in range(L):
        if i in index:
            c = jnp.cos(angles[i] / 2).astype(jnp.complex64)
            s = (-1j * jnp.sin(angles[i] / 2)).astype(jnp.complex64)
            M = jnp.eye(dim, dtype=jnp.complex64)
            M = M.at[j, j].set(c).at[k, k].set(c).at[j, k].set(s).at[k, j].set(s)
        else:
            M = jnp.eye(dim, dtype=jnp.complex64)
        U = jnp.kron(U, M)
    return U


# ----------------------------------------------------------------------------
# Demo / smoke test
# ----------------------------------------------------------------------------
if __name__ == "__main__":
    key = jax.random.PRNGKey(0)
    k_angle, k_xr, k_xi = jax.random.split(key, 3)

    dim, wires = 2, 8            # D = dim**wires = 256
    D = dim ** wires
    N = 3                        # small batch of state columns

    gate = RX(j=0, k=1, index=(0, 3, 5), dim=dim, wires=wires, key=k_angle)

    # deterministic random complex states, normalized per column
    xr0 = jax.random.normal(k_xr, (D, N), dtype=jnp.float32)
    xi0 = jax.random.normal(k_xi, (D, N), dtype=jnp.float32)
    x = (xr0 + 1j * xi0).astype(jnp.complex64)
    x = x / jnp.linalg.norm(x, axis=0, keepdims=True)

    out = jax.block_until_ready(gate(x))                 # batched states
    out_vec = jax.block_until_ready(gate(x[:, 0]))       # single state (N == 1 path)

    # Reference: dense Kronecker U @ x (same math as quforge.RX), done in numpy
    # to avoid any TPU matmul precision ambiguity.
    U_ref = np.asarray(_dense_rx_unitary(dim, gate.j, gate.k, gate.index,
                                         gate.angle, wires))
    ref = U_ref @ np.asarray(x)

    assert out.shape == (D, N) and out.dtype == jnp.complex64
    assert out_vec.shape == (D,) and out_vec.dtype == jnp.complex64
    assert np.allclose(np.asarray(out), ref, atol=1e-4, rtol=1e-4)
    assert np.allclose(np.asarray(out_vec), ref[:, 0], atol=1e-4, rtol=1e-4)

    print("KERNEL_OK")
</pallas_src>

<mosaic_0001>
module attributes {stable_mosaic.version = 11 : i64} {
  func.func @_rx_wires_kernel(%arg0: i32, %arg1: memref<9x256xf32, #tpu.memory_space<vmem>>, %arg2: memref<8x256xf32, #tpu.memory_space<vmem>>, %arg3: memref<8x256xf32, #tpu.memory_space<vmem>>, %arg4: memref<8x256xf32, #tpu.memory_space<vmem>>, %arg5: memref<8x256xf32, #tpu.memory_space<vmem>>) attributes {dimension_semantics = [#tpu.dimension_semantics<parallel>], iteration_bounds = array<i64: 1>, scalar_prefetch = 0 : i64, scratch_operands = 0 : i64, tpu.core_type = #tpu.core_type<tc>, window_params = [{pipeline_mode = #tpu.pipeline_mode<synchronous>, transform_indices = @transform_0, window_bounds = array<i64: 9, 256>}, {transform_indices = @transform_1, window_bounds = array<i64: 8, 256>}, {transform_indices = @transform_2, window_bounds = array<i64: 8, 256>}, {transform_indices = @transform_3, window_bounds = array<i64: 8, 256>}, {transform_indices = @transform_4, window_bounds = array<i64: 8, 256>}]} {
    %c0 = arith.constant 0 : index
    %c0_0 = arith.constant 0 : index
    %0 = vector.load %arg2[%c0, %c0_0] : memref<8x256xf32, #tpu.memory_space<vmem>>, vector<8x256xf32>
    %c0_1 = arith.constant 0 : index
    %c0_2 = arith.constant 0 : index
    %1 = vector.load %arg3[%c0_1, %c0_2] : memref<8x256xf32, #tpu.memory_space<vmem>>, vector<8x256xf32>
    %c0_3 = arith.constant 0 : index
    %c0_4 = arith.constant 0 : index
    %2 = vector.load %arg1[%c0_3, %c0_4] : memref<9x256xf32, #tpu.memory_space<vmem>>, vector<1x256xf32>
    %c1 = arith.constant 1 : index
    %c0_5 = arith.constant 0 : index
    %3 = vector.load %arg1[%c1, %c0_5] : memref<9x256xf32, #tpu.memory_space<vmem>>, vector<1x256xf32>
    %c2 = arith.constant 2 : index
    %c0_6 = arith.constant 0 : index
    %4 = vector.load %arg1[%c2, %c0_6] : memref<9x256xf32, #tpu.memory_space<vmem>>, vector<1x256xf32>
    %c128_i32 = arith.constant 128 : i32
    %5 = tpu.dynamic_rotate %0 by %c128_i32 dim 1 : vector<8x256xf32>, i32 -> vector<8x256xf32>
    %c128_i32_7 = arith.constant 128 : i32
    %6 = tpu.dynamic_rotate %1 by %c128_i32_7 dim 1 : vector<8x256xf32>, i32 -> vector<8x256xf32>
    %c128_i32_8 = arith.constant 128 : i32
    %7 = tpu.dynamic_rotate %0 by %c128_i32_8 dim 1 : vector<8x256xf32>, i32 -> vector<8x256xf32>
    %c128_i32_9 = arith.constant 128 : i32
    %8 = tpu.dynamic_rotate %1 by %c128_i32_9 dim 1 : vector<8x256xf32>, i32 -> vector<8x256xf32>
    %9 = vector.broadcast %2 : vector<1x256xf32> to vector<8x256xf32>
    %10 = arith.mulf %9, %0 : vector<8x256xf32>
    %11 = arith.addf %0, %10 : vector<8x256xf32>
    %12 = vector.broadcast %3 : vector<1x256xf32> to vector<8x256xf32>
    %13 = arith.mulf %12, %6 : vector<8x256xf32>
    %14 = arith.addf %11, %13 : vector<8x256xf32>
    %15 = vector.broadcast %4 : vector<1x256xf32> to vector<8x256xf32>
    %16 = arith.mulf %15, %8 : vector<8x256xf32>
    %17 = arith.addf %14, %16 : vector<8x256xf32>
    %18 = vector.broadcast %2 : vector<1x256xf32> to vector<8x256xf32>
    %19 = arith.mulf %18, %1 : vector<8x256xf32>
    %20 = arith.addf %1, %19 : vector<8x256xf32>
    %21 = vector.broadcast %3 : vector<1x256xf32> to vector<8x256xf32>
    %22 = arith.mulf %21, %5 : vector<8x256xf32>
    %23 = arith.subf %20, %22 : vector<8x256xf32>
    %24 = vector.broadcast %4 : vector<1x256xf32> to vector<8x256xf32>
    %25 = arith.mulf %24, %7 : vector<8x256xf32>
    %26 = arith.subf %23, %25 : vector<8x256xf32>
    %c3 = arith.constant 3 : index
    %c0_10 = arith.constant 0 : index
    %27 = vector.load %arg1[%c3, %c0_10] : memref<9x256xf32, #tpu.memory_space<vmem>>, vector<1x256xf32>
    %c4 = arith.constant 4 : index
    %c0_11 = arith.constant 0 : index
    %28 = vector.load %arg1[%c4, %c0_11] : memref<9x256xf32, #tpu.memory_space<vmem>>, vector<1x256xf32>
    %c5 = arith.constant 5 : index
    %c0_12 = arith.constant 0 : index
    %29 = vector.load %arg1[%c5, %c0_12] : memref<9x256xf32, #tpu.memory_space<vmem>>, vector<1x256xf32>
    %c240_i32 = arith.constant 240 : i32
    %30 = tpu.dynamic_rotate %17 by %c240_i32 dim 1 : vector<8x256xf32>, i32 -> vector<8x256xf32>
    %c240_i32_13 = arith.constant 240 : i32
    %31 = tpu.dynamic_rotate %26 by %c240_i32_13 dim 1 : vector<8x256xf32>, i32 -> vector<8x256xf32>
    %c16_i32 = arith.constant 16 : i32
    %32 = tpu.dynamic_rotate %17 by %c16_i32 dim 1 : vector<8x256xf32>, i32 -> vector<8x256xf32>
    %c16_i32_14 = arith.constant 16 : i32
    %33 = tpu.dynamic_rotate %26 by %c16_i32_14 dim 1 : vector<8x256xf32>, i32 -> vector<8x256xf32>
    %34 = vector.broadcast %27 : vector<1x256xf32> to vector<8x256xf32>
    %35 = arith.mulf %34, %17 : vector<8x256xf32>
    %36 = arith.addf %17, %35 : vector<8x256xf32>
    %37 = vector.broadcast %28 : vector<1x256xf32> to vector<8x256xf32>
    %38 = arith.mulf %37, %31 : vector<8x256xf32>
    %39 = arith.addf %36, %38 : vector<8x256xf32>
    %40 = vector.broadcast %29 : vector<1x256xf32> to vector<8x256xf32>
    %41 = arith.mulf %40, %33 : vector<8x256xf32>
    %42 = arith.addf %39, %41 : vector<8x256xf32>
    %43 = vector.broadcast %27 : vector<1x256xf32> to vector<8x256xf32>
    %44 = arith.mulf %43, %26 : vector<8x256xf32>
    %45 = arith.addf %26, %44 : vector<8x256xf32>
    %46 = vector.broadcast %28 : vector<1x256xf32> to vector<8x256xf32>
    %47 = arith.mulf %46, %30 : vector<8x256xf32>
    %48 = arith.subf %45, %47 : vector<8x256xf32>
    %49 = vector.broadcast %29 : vector<1x256xf32> to vector<8x256xf32>
    %50 = arith.mulf %49, %32 : vector<8x256xf32>
    %51 = arith.subf %48, %50 : vector<8x256xf32>
    %c6 = arith.constant 6 : index
    %c0_15 = arith.constant 0 : index
    %52 = vector.load %arg1[%c6, %c0_15] : memref<9x256xf32, #tpu.memory_space<vmem>>, vector<1x256xf32>
    %c7 = arith.constant 7 : index
    %c0_16 = arith.constant 0 : index
    %53 = vector.load %arg1[%c7, %c0_16] : memref<9x256xf32, #tpu.memory_space<vmem>>, vector<1x256xf32>
    %c8 = arith.constant 8 : index
    %c0_17 = arith.constant 0 : index
    %54 = vector.load %arg1[%c8, %c0_17] : memref<9x256xf32, #tpu.memory_space<vmem>>, vector<1x256xf32>
    %c252_i32 = arith.constant 252 : i32
    %55 = tpu.dynamic_rotate %42 by %c252_i32 dim 1 : vector<8x256xf32>, i32 -> vector<8x256xf32>
    %c252_i32_18 = arith.constant 252 : i32
    %56 = tpu.dynamic_rotate %51 by %c252_i32_18 dim 1 : vector<8x256xf32>, i32 -> vector<8x256xf32>
    %c4_i32 = arith.constant 4 : i32
    %57 = tpu.dynamic_rotate %42 by %c4_i32 dim 1 : vector<8x256xf32>, i32 -> vector<8x256xf32>
    %c4_i32_19 = arith.constant 4 : i32
    %58 = tpu.dynamic_rotate %51 by %c4_i32_19 dim 1 : vector<8x256xf32>, i32 -> vector<8x256xf32>
    %59 = vector.broadcast %52 : vector<1x256xf32> to vector<8x256xf32>
    %60 = arith.mulf %59, %42 : vector<8x256xf32>
    %61 = arith.addf %42, %60 : vector<8x256xf32>
    %62 = vector.broadcast %53 : vector<1x256xf32> to vector<8x256xf32>
    %63 = arith.mulf %62, %56 : vector<8x256xf32>
    %64 = arith.addf %61, %63 : vector<8x256xf32>
    %65 = vector.broadcast %54 : vector<1x256xf32> to vector<8x256xf32>
    %66 = arith.mulf %65, %58 : vector<8x256xf32>
    %67 = arith.addf %64, %66 : vector<8x256xf32>
    %68 = vector.broadcast %52 : vector<1x256xf32> to vector<8x256xf32>
    %69 = arith.mulf %68, %51 : vector<8x256xf32>
    %70 = arith.addf %51, %69 : vector<8x256xf32>
    %71 = vector.broadcast %53 : vector<1x256xf32> to vector<8x256xf32>
    %72 = arith.mulf %71, %55 : vector<8x256xf32>
    %73 = arith.subf %70, %72 : vector<8x256xf32>
    %74 = vector.broadcast %54 : vector<1x256xf32> to vector<8x256xf32>
    %75 = arith.mulf %74, %57 : vector<8x256xf32>
    %76 = arith.subf %73, %75 : vector<8x256xf32>
    %c0_20 = arith.constant 0 : index
    %c0_21 = arith.constant 0 : index
    %77 = vector.load %arg4[%c0_20, %c0_21] : memref<8x256xf32, #tpu.memory_space<vmem>>, vector<8x256xf32>
    tpu.vector_store %arg4[%c0_20, %c0_21], %67 {strides = array<i32>} : memref<8x256xf32, #tpu.memory_space<vmem>>, vector<8x256xf32>,
    %c0_22 = arith.constant 0 : index
    %c0_23 = arith.constant 0 : index
    %78 = vector.load %arg5[%c0_22, %c0_23] : memref<8x256xf32, #tpu.memory_space<vmem>>, vector<8x256xf32>
    tpu.vector_store %arg5[%c0_22, %c0_23], %76 {strides = array<i32>} : memref<8x256xf32, #tpu.memory_space<vmem>>, vector<8x256xf32>,
    return
  }
  func.func @transform_0(%arg0: i32) -> (i32, i32) {
    %c0_i32 = arith.constant 0 : i32
    %c0_i32_0 = arith.constant 0 : i32
    %c0_i32_1 = arith.constant 0 : i32
    return %c0_i32, %c0_i32_0 : i32, i32
  }
  func.func @transform_1(%arg0: i32) -> (i32, i32) {
    %c0_i32 = arith.constant 0 : i32
    %c0_i32_0 = arith.constant 0 : i32
    return %arg0, %c0_i32 : i32, i32
  }
  func.func @transform_2(%arg0: i32) -> (i32, i32) {
    %c0_i32 = arith.constant 0 : i32
    %c0_i32_0 = arith.constant 0 : i32
    return %arg0, %c0_i32 : i32, i32
  }
  func.func @transform_3(%arg0: i32) -> (i32, i32) {
    %c0_i32 = arith.constant 0 : i32
    %c0_i32_0 = arith.constant 0 : i32
    return %arg0, %c0_i32 : i32, i32
  }
  func.func @transform_4(%arg0: i32) -> (i32, i32) {
    %c0_i32 = arith.constant 0 : i32
    %c0_i32_0 = arith.constant 0 : i32
    return %arg0, %c0_i32 : i32, i32
  }
}

</mosaic_0001>

<llo_original>
// kernel: tpu_custom_call.1
$region0: #{tpu_custom_call.1}
  #allocation0 [shape = 'u32[]', space=smem, size = 0x4, offset = 0x4, fixed_abs, tag = 'smem constant byte address 0x4 - core index']
  #allocation1 [shape = 'u32[144,128]{1,0:T(1,128)}', space=vmem, size = 0x12000, scoped, tag = 'internal scratch']
  %s0 = inlined_call_operand.vmem [shape: f32[9,256], index: 0, kind: input, shape index: {}]
  %s1 = inlined_call_operand.hbm [shape: f32[8,256], index: 1, kind: input, shape index: {}, may-alias: {1,3}]
  %s2 = inlined_call_operand.hbm [shape: f32[8,256], index: 2, kind: input, shape index: {}, may-alias: {2,4}]
  %s3 = inlined_call_operand.hbm [shape: f32[8,256], index: 3, kind: output, shape index: {0}, may-alias: {1,3}]
  %s4 = inlined_call_operand.hbm [shape: f32[8,256], index: 4, kind: output, shape index: {1}, may-alias: {2,4}]
  %5 = xla_tuple %s3, %s4
  %s6 = sld [smem:[#allocation0]]
  $region38: #{tpu_custom_call.1} parent=0
    _
  %s8 = ssub.s32 1, %s6
  %s9 = scalar_select 0, %s8, %s6
  $region1: #{tpu_custom_call.1} parent=0
    #allocation2 [shape = 'u8[8192]{0}', space=vmem, size = 0x2000, scoped, tag = 'input window, operand 1, single buffered']
    #allocation3 [shape = 's32[1]{0}', space=sflag, size = 0x4, scoped, tag = 'scoped memory for tpu_custom_call.1']
    #allocation4 [shape = 's32[1]{0}', space=sflag, size = 0x4, scoped, tag = 'scoped memory for tpu_custom_call.1']
    #allocation5 [shape = 'u8[8192]{0}', space=vmem, size = 0x2000, scoped, tag = 'input window, operand 2, single buffered']
    #allocation6 [shape = 's32[1]{0}', space=sflag, size = 0x4, scoped, tag = 'scoped memory for tpu_custom_call.1']
    #allocation7 [shape = 'u8[8192]{0}', space=vmem, size = 0x2000, scoped, tag = 'output window, operand 0, single buffered']
    #allocation8 [shape = 'u8[8192]{0}', space=vmem, size = 0x2000, scoped, tag = 'output window, operand 1, single buffered']
    #allocation9 [shape = 's32[1]{0}', space=sflag, size = 0x4, scoped, tag = 'scoped memory for tpu_custom_call.1']
    %10 = vsyncpa [#allocation3], 0
    %11 = vsyncpa [#allocation6], 0
    %12 = vsyncpa [#allocation4], 0
    %13 = vsyncpa [#allocation9], 0
    // Predicated region
    $region2: #{tpu_custom_call.1} parent=1 // pred_check
      _
    $region3: #{tpu_custom_call.1} parent=1 // pred_check_branch
      %15 = sbr.rel (0) target = $region5
    $region4: #{tpu_custom_call.1} parent=1 // pred_region
      _
    $region5: #{tpu_custom_call.1} parent=1 // pred_fallthru
      _
    // Predicated region
    $region6: #{tpu_custom_call.1} parent=1 // pred_check
      _
    $region7: #{tpu_custom_call.1} parent=1 // pred_check_branch
      %17 = sbr.rel (0) target = $region9
    $region8: #{tpu_custom_call.1} parent=1 // pred_region
      %s19 = ssub.s32 256, 256
      %20 = vsyncadd [#allocation3], %s19
      %s22 = sshll.u32 [#allocation2], 4
      %s23 = int_to_ptr.vmem [resolvable:$true] %s22
      %25 = dma.hbm_to_vmem [thread:$0]  %s1, 256, %s23, [#allocation3]
    $region9: #{tpu_custom_call.1} parent=1 // pred_fallthru
      _
    // Predicated region
    $region10: #{tpu_custom_call.1} parent=1 // pred_check
      _
    $region11: #{tpu_custom_call.1} parent=1 // pred_check_branch
      %27 = sbr.rel (0) target = $region13
    $region12: #{tpu_custom_call.1} parent=1 // pred_region
      %s29 = ssub.s32 256, 256
      %30 = vsyncadd [#allocation6], %s29
      %s32 = sshll.u32 [#allocation5], 4
      %s33 = int_to_ptr.vmem [resolvable:$true] %s32
      %35 = dma.hbm_to_vmem [thread:$0]  %s2, 256, %s33, [#allocation6]
    $region13: #{tpu_custom_call.1} parent=1 // pred_fallthru
      _
    // Predicated region
    $region14: #{tpu_custom_call.1} parent=1 // pred_check
      _
    $region15: #{tpu_custom_call.1} parent=1 // pred_check_branch
      %37 = sbr.rel (0) target = $region17
    $region16: #{tpu_custom_call.1} parent=1 // pred_region
      %38 = dma.done [#allocation3], 256
    $region17: #{tpu_custom_call.1} parent=1 // pred_fallthru
      _
    // Predicated region
    $region18: #{tpu_custom_call.1} parent=1 // pred_check
      _
    $region19: #{tpu_custom_call.1} parent=1 // pred_check_branch
      %40 = sbr.rel (0) target = $region21
    $region20: #{tpu_custom_call.1} parent=1 // pred_region
      %41 = dma.done [#allocation6], 256
    $region21: #{tpu_custom_call.1} parent=1 // pred_fallthru
      _
    %v42 = vld [vmem:[#allocation2] sm:$0xff]
    %v43 = vld [vmem:[#allocation2 + $0x8] sm:$0xff]
    %v44 = vld [vmem:[#allocation5] sm:$0xff]
    %v45 = vld [vmem:[#allocation5 + $0x8] sm:$0xff]
    %v46 = vld [vmem:[%s0] ss:$8 sm:$0x3]
    %s47 = scalar_lea.vmem %s0, 1
    %v48 = vld [vmem:[%s47] ss:$8 sm:$0x3]
    %s49 = scalar_lea.vmem %s0, 2
    %v50 = vld [vmem:[%s49] ss:$8 sm:$0x3]
    %v52 = vlaneseq
    %v53 = vshrl.u32 %v52, 7
    %v54 = vsub.s32 0, %v53
    %v55 = vrot.slane %v46, %v54
    %v56 = vlaneseq
    %v57 = vshrl.u32 %v56, 7
    %v58 = vsub.s32 1, %v57
    %v59 = vrot.slane %v46, %v58
    %v62 = vmul.f32 %v55, %v42
    %v63 = vmul.f32 %v59, %v43
    %v64 = vadd.f32 %v42, %v62
    %v65 = vadd.f32 %v43, %v63
    %v67 = vlaneseq
    %v68 = vshrl.u32 %v67, 7
    %v69 = vsub.s32 0, %v68
    %v70 = vrot.slane %v48, %v69
    %v71 = vlaneseq
    %v72 = vshrl.u32 %v71, 7
    %v73 = vsub.s32 1, %v72
    %v74 = vrot.slane %v48, %v73
    %v77 = vmul.f32 %v70, %v45
    %v78 = vmul.f32 %v74, %v44
    %v79 = vadd.f32 %v64, %v77
    %v80 = vadd.f32 %v65, %v78
    %v82 = vlaneseq
    %v83 = vshrl.u32 %v82, 7
    %v84 = vsub.s32 0, %v83
    %v85 = vrot.slane %v50, %v84
    %v86 = vlaneseq
    %v87 = vshrl.u32 %v86, 7
    %v88 = vsub.s32 1, %v87
    %v89 = vrot.slane %v50, %v88
    %v92 = vmul.f32 %v85, %v45
    %v93 = vmul.f32 %v89, %v44
    %v94 = vadd.f32 %v79, %v92
    %v95 = vadd.f32 %v80, %v93
    %v96 = vmul.f32 %v55, %v44
    %v97 = vmul.f32 %v59, %v45
    %v98 = vadd.f32 %v44, %v96
    %v99 = vadd.f32 %v45, %v97
    %v100 = vmul.f32 %v70, %v43
    %v101 = vmul.f32 %v74, %v42
    %v102 = vsub.f32 %v98, %v100
    %v103 = vsub.f32 %v99, %v101
    %v104 = vmul.f32 %v85, %v43
    %v105 = vmul.f32 %v89, %v42
    %v106 = vsub.f32 %v102, %v104
    %v107 = vsub.f32 %v103, %v105
    %s108 = scalar_lea.vmem %s0, 3
    %v109 = vld [vmem:[%s108] ss:$8 sm:$0x3]
    %s110 = scalar_lea.vmem %s0, 4
    %v111 = vld [vmem:[%s110] ss:$8 sm:$0x3]
    %s112 = scalar_lea.vmem %s0, 5
    %v113 = vld [vmem:[%s112] ss:$8 sm:$0x3]
    %114 = vrot.lane.b32.xlu0 %v94, 112
    %v115 = vpop.permute.xlu0 %114
    %116 = vrot.lane.b32.xlu0 %v95, 112
    %v117 = vpop.permute.xlu0 %116
    %v118 = vlaneseq
    %v119 = vand.u32 %v118, 127
    %vm120 = vcmp.lt.s32.totalorder %v119, 112
    %v121 = vsel %vm120, %v115, %v117
    %v122 = vsel %vm120, %v117, %v115
    %123 = vrot.lane.b32.xlu0 %v106, 112
    %v124 = vpop.permute.xlu0 %123
    %125 = vrot.lane.b32.xlu0 %v107, 112
    %v126 = vpop.permute.xlu0 %125
    %v127 = vsel %vm120, %v124, %v126
    %v128 = vsel %vm120, %v126, %v124
    %129 = vrot.lane.b32.xlu0 %v94, 16
    %v130 = vpop.permute.xlu0 %129
    %131 = vrot.lane.b32.xlu0 %v95, 16
    %v132 = vpop.permute.xlu0 %131
    %vm133 = vcmp.lt.s32.totalorder %v119, 16
    %v134 = vsel %vm133, %v130, %v132
    %v135 = vsel %vm133, %v132, %v130
    %136 = vrot.lane.b32.xlu0 %v106, 16
    %v137 = vpop.permute.xlu0 %136
    %138 = vrot.lane.b32.xlu0 %v107, 16
    %v139 = vpop.permute.xlu0 %138
    %v140 = vsel %vm133, %v137, %v139
    %v141 = vsel %vm133, %v139, %v137
    %v143 = vlaneseq
    %v144 = vshrl.u32 %v143, 7
    %v145 = vsub.s32 0, %v144
    %v146 = vrot.slane %v109, %v145
    %v147 = vlaneseq
    %v148 = vshrl.u32 %v147, 7
    %v149 = vsub.s32 1, %v148
    %v150 = vrot.slane %v109, %v149
    %v153 = vmul.f32 %v146, %v94
    %v154 = vmul.f32 %v150, %v95
    %v155 = vadd.f32 %v94, %v153
    %v156 = vadd.f32 %v95, %v154
    %v158 = vlaneseq
    %v159 = vshrl.u32 %v158, 7
    %v160 = vsub.s32 0, %v159
    %v161 = vrot.slane %v111, %v160
    %v162 = vlaneseq
    %v163 = vshrl.u32 %v162, 7
    %v164 = vsub.s32 1, %v163
    %v165 = vrot.slane %v111, %v164
    %v168 = vmul.f32 %v161, %v127
    %v169 = vmul.f32 %v165, %v128
    %v170 = vadd.f32 %v155, %v168
    %v171 = vadd.f32 %v156, %v169
    %v173 = vlaneseq
    %v174 = vshrl.u32 %v173, 7
    %v175 = vsub.s32 0, %v174
    %v176 = vrot.slane %v113, %v175
    %v177 = vlaneseq
    %v178 = vshrl.u32 %v177, 7
    %v179 = vsub.s32 1, %v178
    %v180 = vrot.slane %v113, %v179
    %v183 = vmul.f32 %v176, %v141
    %v184 = vmul.f32 %v180, %v140
    %v185 = vadd.f32 %v170, %v183
    %v186 = vadd.f32 %v171, %v184
    %v187 = vmul.f32 %v146, %v106
    %v188 = vmul.f32 %v150, %v107
    %v189 = vadd.f32 %v106, %v187
    %v190 = vadd.f32 %v107, %v188
    %v191 = vmul.f32 %v161, %v121
    %v192 = vmul.f32 %v165, %v122
    %v193 = vsub.f32 %v189, %v191
    %v194 = vsub.f32 %v190, %v192
    %v195 = vmul.f32 %v176, %v135
    %v196 = vmul.f32 %v180, %v134
    %v197 = vsub.f32 %v193, %v195
    %v198 = vsub.f32 %v194, %v196
    %s199 = scalar_lea.vmem %s0, 6
    %v200 = vld [vmem:[%s199] ss:$8 sm:$0x3]
    %s201 = scalar_lea.vmem %s0, 7
    %v202 = vld [vmem:[%s201] ss:$8 sm:$0x3]
    %s203 = scalar_lea.vmem %s0, 16
    %v204 = vld [vmem:[%s203] ss:$8 sm:$0x3]
    %205 = vrot.lane.b32.xlu0 %v185, 124
    %v206 = vpop.permute.xlu0 %205
    %207 = vrot.lane.b32.xlu0 %v186, 124
    %v208 = vpop.permute.xlu0 %207
    %vm209 = vcmp.lt.s32.totalorder %v119, 124
    %v210 = vsel %vm209, %v206, %v208
    %v211 = vsel %vm209, %v208, %v206
    %212 = vrot.lane.b32.xlu0 %v197, 124
    %v213 = vpop.permute.xlu0 %212
    %214 = vrot.lane.b32.xlu0 %v198, 124
    %v215 = vpop.permute.xlu0 %214
    %v216 = vsel %vm209, %v213, %v215
    %v217 = vsel %vm209, %v215, %v213
    %218 = vrot.lane.b32.xlu0 %v185, 4
    %v219 = vpop.permute.xlu0 %218
    %220 = vrot.lane.b32.xlu0 %v186, 4
    %v221 = vpop.permute.xlu0 %220
    %vm222 = vcmp.lt.s32.totalorder %v119, 4
    %v223 = vsel %vm222, %v219, %v221
    %v224 = vsel %vm222, %v221, %v219
    %225 = vrot.lane.b32.xlu0 %v197, 4
    %v226 = vpop.permute.xlu0 %225
    %227 = vrot.lane.b32.xlu0 %v198, 4
    %v228 = vpop.permute.xlu0 %227
    %v229 = vsel %vm222, %v226, %v228
    %v230 = vsel %vm222, %v228, %v226
    %v232 = vlaneseq
    %v233 = vshrl.u32 %v232, 7
    %v234 = vsub.s32 0, %v233
    %v235 = vrot.slane %v200, %v234
    %v236 = vlaneseq
    %v237 = vshrl.u32 %v236, 7
    %v238 = vsub.s32 1, %v237
    %v239 = vrot.slane %v200, %v238
    %v242 = vmul.f32 %v235, %v185
    %v243 = vmul.f32 %v239, %v186
    %v244 = vadd.f32 %v185, %v242
    %v245 = vadd.f32 %v186, %v243
    %v247 = vlaneseq
    %v248 = vshrl.u32 %v247, 7
    %v249 = vsub.s32 0, %v248
    %v250 = vrot.slane %v202, %v249
    %v251 = vlaneseq
    %v252 = vshrl.u32 %v251, 7
    %v253 = vsub.s32 1, %v252
    %v254 = vrot.slane %v202, %v253
    %v257 = vmul.f32 %v250, %v216
    %v258 = vmul.f32 %v254, %v217
    %v259 = vadd.f32 %v244, %v257
    %v260 = vadd.f32 %v245, %v258
    %v262 = vlaneseq
    %v263 = vshrl.u32 %v262, 7
    %v264 = vsub.s32 0, %v263
    %v265 = vrot.slane %v204, %v264
    %v266 = vlaneseq
    %v267 = vshrl.u32 %v266, 7
    %v268 = vsub.s32 1, %v267
    %v269 = vrot.slane %v204, %v268
    %v272 = vmul.f32 %v265, %v230
    %v273 = vmul.f32 %v269, %v229
    %v274 = vadd.f32 %v259, %v272
    %v275 = vadd.f32 %v260, %v273
    %v276 = vmul.f32 %v235, %v197
    %v277 = vmul.f32 %v239, %v198
    %v278 = vadd.f32 %v197, %v276
    %v279 = vadd.f32 %v198, %v277
    %v280 = vmul.f32 %v250, %v210
    %v281 = vmul.f32 %v254, %v211
    %v282 = vsub.f32 %v278, %v280
    %v283 = vsub.f32 %v279, %v281
    %v284 = vmul.f32 %v265, %v224
    %v285 = vmul.f32 %v269, %v223
    %v286 = vsub.f32 %v282, %v284
    %v287 = vsub.f32 %v283, %v285
    %288 = vst [vmem:[#allocation7] sm:$0xff] %v274
    %289 = vst [vmem:[#allocation7 + $0x8] sm:$0xff] %v275
    %290 = vst [vmem:[#allocation8] sm:$0xff] %v286
    %291 = vst [vmem:[#allocation8 + $0x8] sm:$0xff] %v287
    // Predicated region
    $region22: #{tpu_custom_call.1} parent=1 // pred_check
      _
    $region23: #{tpu_custom_call.1} parent=1 // pred_check_branch
      %293 = sbr.rel (0) target = $region25
    $region24: #{tpu_custom_call.1} parent=1 // pred_region
      %s295 = ssub.s32 256, 256
      %296 = vsyncadd [#allocation4], %s295
      %s298 = sshll.u32 [#allocation7], 4
      %s299 = int_to_ptr.vmem [resolvable:$true] %s298
      %301 = dma.vmem_to_hbm [thread:$0]  %s299, 256, %s3, [#allocation4]
    $region25: #{tpu_custom_call.1} parent=1 // pred_fallthru
      _
    // Predicated region
    $region26: #{tpu_custom_call.1} parent=1 // pred_check
      _
    $region27: #{tpu_custom_call.1} parent=1 // pred_check_branch
      %303 = sbr.rel (0) target = $region29
    $region28: #{tpu_custom_call.1} parent=1 // pred_region
      %s305 = ssub.s32 256, 256
      %306 = vsyncadd [#allocation9], %s305
      %s308 = sshll.u32 [#allocation8], 4
      %s309 = int_to_ptr.vmem [resolvable:$true] %s308
      %311 = dma.vmem_to_hbm [thread:$0]  %s309, 256, %s4, [#allocation9]
    $region29: #{tpu_custom_call.1} parent=1 // pred_fallthru
      _
    // Predicated region
    $region30: #{tpu_custom_call.1} parent=1 // pred_check
      _
    $region31: #{tpu_custom_call.1} parent=1 // pred_check_branch
      %313 = sbr.rel (0) target = $region33
    $region32: #{tpu_custom_call.1} parent=1 // pred_region
      %314 = dma.done [#allocation4], 256
    $region33: #{tpu_custom_call.1} parent=1 // pred_fallthru
      _
    // Predicated region
    $region34: #{tpu_custom_call.1} parent=1 // pred_check
      _
    $region35: #{tpu_custom_call.1} parent=1 // pred_check_branch
      %316 = sbr.rel (0) target = $region37
    $region36: #{tpu_custom_call.1} parent=1 // pred_region
      %317 = dma.done [#allocation9], 256
    $region37: #{tpu_custom_call.1} parent=1 // pred_fallthru
      _
    %318 = vsyncpa [#allocation3], 1
    %319 = vsyncpa [#allocation6], 1
    %320 = vsyncpa [#allocation4], 1
    %321 = vsyncpa [#allocation9], 1

</llo_original>
